<compile_context>
chip_gen: v6e
topology: v6e:2x2x1
jax: 0.10.0
libtpu: 0.0.40
codegen_flags: <defaults>
</compile_context>

<pallas_src>
import functools

import jax
import jax.numpy as jnp
from jax import lax
from jax.experimental import pallas as pl
from jax.experimental.pallas import tpu as pltpu

_LANES = 128
_SUBLANES = 8
# (4096, 128) f32 block = 2 MiB per input per pipeline buffer.
# 2 inputs x 2 buffers = 8 MiB streamed + a few MiB of element-wise temps +
# two (8,128) accumulators -> comfortably inside a 32 MiB scoped-VMEM limit
# on every generation (v5e/v6e 128 MiB physical, v7x 64 MiB).
_MAX_BLOCK_ROWS = 4096


def _num_tensorcores() -> int:
    """Best-effort TensorCores-per-chip (2 on v7x, 1 on v5e/v6e)."""
    info = None
    try:
        info = pltpu.get_tpu_info()
    except Exception:
        info = None
    if info is not None:
        for name in ("num_tensorcores", "tensorcores_per_chip",
                     "cores_per_chip", "num_cores", "core_count"):
            v = getattr(info, name, None)
            if v is None:
                continue
            try:
                v = int(v)
            except Exception:
                continue
            if v > 0:
                return v
    try:
        kind = jax.devices()[0].device_kind.lower()
        if "v7" in kind:
            return 2
    except Exception:
        pass
    return 1


def _dice_kernel(x_ref, t_ref, out_ref, inter_acc, denom_acc, *,
                 total_rows, block_rows, num_blocks, blocks_per_split,
                 mask_rows, has_oob_blocks, single_block):
    def sigmoid(v):
        # sigmoid(x) == 0.5*tanh(0.5*x)+0.5 : one EUP op + 2 VALU ops instead
        # of an exact f32 divide expanding on the VALU.
        return 0.5 * jnp.tanh(0.5 * v) + 0.5

    if single_block:
        # grid == (1, 1): reduce straight to scalars, skip the accumulators.
        x = x_ref[...].astype(jnp.float32)
        t = t_ref[...].astype(jnp.float32)
        s = sigmoid(x)
        out_ref[0, 0] = jnp.sum(s * t)
        out_ref[0, 1] = jnp.sum(s) + jnp.sum(t)
        return

    c = pl.program_id(0)               # split index (TensorCore) - "parallel"
    i = pl.program_id(1)               # block within split       - "arbitrary"
    block_idx = c * blocks_per_split + i

    @pl.when(i == 0)
    def _():
        inter_acc[...] = jnp.zeros_like(inter_acc)
        denom_acc[...] = jnp.zeros_like(denom_acc)

    def accumulate(masked):
        def body():
            x = x_ref[...].astype(jnp.float32)
            t = t_ref[...].astype(jnp.float32)
            s = sigmoid(x)
            tt = t
            if masked:
                # Only the genuinely-last (partial) block pays the mask.
                row = block_idx * block_rows + lax.broadcasted_iota(
                    jnp.int32, (block_rows, _LANES), 0)
                keep = row < total_rows
                s = jnp.where(keep, s, 0.0)
                tt = jnp.where(keep, tt, 0.0)
            groups = block_rows // _SUBLANES
            # Reduce the block to a single vreg with pure VALU vreg adds,
            # then accumulate into the tiny (8,128) VMEM scratch.
            inter_acc[...] += jnp.sum(
                (s * tt).reshape(groups, _SUBLANES, _LANES), axis=0)
            denom_acc[...] += jnp.sum(
                (s + tt).reshape(groups, _SUBLANES, _LANES), axis=0)
        return body

    in_range = block_idx < num_blocks
    if mask_rows:
        is_tail = block_idx == num_blocks - 1
        plain = jnp.logical_not(is_tail)
        if has_oob_blocks:
            plain = jnp.logical_and(plain, in_range)
        pl.when(plain)(accumulate(False))
        pl.when(is_tail)(accumulate(True))
    else:
        if has_oob_blocks:
            pl.when(in_range)(accumulate(False))
        else:
            accumulate(False)()

    @pl.when(i == blocks_per_split - 1)
    def _():
        # Single cross-lane/sublane reduction per split (16 vregs -> scalar).
        out_ref[0, 0] = jnp.sum(inter_acc[...])
        out_ref[0, 1] = jnp.sum(denom_acc[...])


def dice_loss(inputs, targets, smooth=1.0):
    """Pallas implementation of DiceLoss.forward (returns a scalar f32).

    Inputs/targets may be any shape; targets should be passed in their native
    narrow dtype (bool/int8/bf16 masks) - the kernel upcasts in-kernel, so the
    memory-bound reduction reads fewer HBM bytes.
    """
    smooth = float(smooth)
    x = jnp.ravel(inputs)
    t = jnp.ravel(targets)
    n = x.shape[0]

    n_main = (n // _LANES) * _LANES
    tail_inter = jnp.float32(0.0)
    tail_denom = jnp.float32(0.0)
    if n_main != n:
        # <128-element lane tail: summed with plain jnp; no padded full copy.
        xt = x[n_main:].astype(jnp.float32)
        tt = t[n_main:].astype(jnp.float32)
        st = jax.nn.sigmoid(xt)
        tail_inter = jnp.sum(st * tt)
        tail_denom = jnp.sum(st) + jnp.sum(tt)
        # TODO(synk): unaligned path still pays one slice copy of the aligned
        # body; a 1D lane-masked kernel input would remove it.
        x = x[:n_main]
        t = t[:n_main]

    total_rows = n_main // _LANES
    if total_rows == 0:
        inter = tail_inter
        denom = tail_denom
    else:
        x2 = x.reshape(total_rows, _LANES)
        t2 = t.reshape(total_rows, _LANES)

        single_block = total_rows <= _MAX_BLOCK_ROWS
        block_rows = total_rows if single_block else _MAX_BLOCK_ROWS
        num_blocks = pl.cdiv(total_rows, block_rows)
        mask_rows = (not single_block) and (total_rows % block_rows != 0)

        # Split the reduction over TensorCores on multi-TC chips (v7x): each
        # split emits its own (inter, denom) partials.  On single-TC chips the
        # grid stays (1, num_blocks) and behaves like the plain reduction.
        n_splits = 2 if (num_blocks >= 2 and _num_tensorcores() >= 2) else 1
        blocks_per_split = pl.cdiv(num_blocks, n_splits)
        has_oob_blocks = blocks_per_split * n_splits != num_blocks

        if has_oob_blocks:
            # Clamp the overhang iteration to a valid block (its accumulation
            # is skipped in-kernel); only exists on the 2-TC path, where the
            # duplicate DMA is hidden under the other core.
            def in_map(c, i):
                return (jnp.minimum(c * blocks_per_split + i, num_blocks - 1), 0)
        else:
            def in_map(c, i):
                return (c * blocks_per_split + i, 0)

        kernel = functools.partial(
            _dice_kernel,
            total_rows=total_rows,
            block_rows=block_rows,
            num_blocks=num_blocks,
            blocks_per_split=blocks_per_split,
            mask_rows=mask_rows,
            has_oob_blocks=has_oob_blocks,
            single_block=single_block,
        )

        partials = pl.pallas_call(
            kernel,
            out_shape=jax.ShapeDtypeStruct((n_splits, 2), jnp.float32),
            grid_spec=pltpu.PrefetchScalarGridSpec(
                num_scalar_prefetch=0,
                grid=(n_splits, blocks_per_split),
                in_specs=[
                    pl.BlockSpec((block_rows, _LANES), in_map),
                    pl.BlockSpec((block_rows, _LANES), in_map),
                ],
                out_specs=pl.BlockSpec(
                    (1, 2), lambda c, i: (c, 0), memory_space=pltpu.SMEM
                ),
                scratch_shapes=[
                    pltpu.VMEM((_SUBLANES, _LANES), jnp.float32),  # intersection
                    pltpu.VMEM((_SUBLANES, _LANES), jnp.float32),  # denominator
                ],
            ),
            compiler_params=pltpu.CompilerParams(
                dimension_semantics=("parallel", "arbitrary"),
                vmem_limit_bytes=32 * 1024 * 1024,
            ),
        )(x2, t2)

        inter = jnp.sum(partials[:, 0]) + tail_inter
        denom = jnp.sum(partials[:, 1]) + tail_denom

    dice = (2.0 * inter + smooth) / (denom + smooth)
    return 1.0 - dice


def _dice_loss_ref(inputs, targets, smooth=1.0):
    x = jax.nn.sigmoid(jnp.ravel(inputs).astype(jnp.float32))
    t = jnp.ravel(targets).astype(jnp.float32)
    inter = jnp.sum(x * t)
    dice = (2.0 * inter + smooth) / (jnp.sum(x) + jnp.sum(t) + smooth)
    return 1.0 - dice


if __name__ == "__main__":
    key = jax.random.PRNGKey(0)
    k1, k2, k3, k4 = jax.random.split(key, 4)

    # Segmentation-head sized example: f32 logits, narrow-dtype (bf16) binary
    # mask -- the kernel upcasts targets in-kernel, no pre-cast to f32 needed.
    x = jax.random.normal(k1, (2, 4, 16, 16), dtype=jnp.float32)
    t = (jax.random.uniform(k2, (2, 4, 16, 16)) > 0.5).astype(jnp.bfloat16)
    loss = jax.block_until_ready(dice_loss(x, t))
    ref = jax.block_until_ready(_dice_loss_ref(x, t))
    assert jnp.allclose(loss, ref, rtol=1e-4, atol=1e-4), (loss, ref)

    # Unaligned element count (exercises the in-wrapper lane-tail path).
    x2 = jax.random.normal(k3, (2, 3, 10, 10), dtype=jnp.float32)
    t2 = (jax.random.uniform(k4, (2, 3, 10, 10)) > 0.5).astype(jnp.float32)
    loss2 = jax.block_until_ready(dice_loss(x2, t2))
    ref2 = jax.block_until_ready(_dice_loss_ref(x2, t2))
    assert jnp.allclose(loss2, ref2, rtol=1e-4, atol=1e-4), (loss2, ref2)

    print("KERNEL_OK")
</pallas_src>

<mosaic_0001>
module attributes {stable_mosaic.version = 11 : i64} {
  func.func @_dice_kernel(%arg0: i32, %arg1: i32, %arg2: memref<16x128xf32, #tpu.memory_space<vmem>>, %arg3: memref<16x128xbf16, #tpu.memory_space<vmem>>, %arg4: memref<1x2xf32, #tpu.memory_space<smem>>, %arg5: memref<8x128xf32, #tpu.memory_space<vmem>>, %arg6: memref<8x128xf32, #tpu.memory_space<vmem>>) attributes {dimension_semantics = [#tpu.dimension_semantics<parallel>, #tpu.dimension_semantics<arbitrary>], iteration_bounds = array<i64: 1, 1>, scalar_prefetch = 0 : i64, scratch_operands = 2 : i64, tpu.core_type = #tpu.core_type<tc>, window_params = [{transform_indices = @transform_0, window_bounds = array<i64: 16, 128>}, {transform_indices = @transform_1, window_bounds = array<i64: 16, 128>}, {transform_indices = @transform_2, window_bounds = array<i64: 1, 2>}]} {
    %c0 = arith.constant 0 : index
    %c0_0 = arith.constant 0 : index
    %0 = vector.load %arg2[%c0, %c0_0] : memref<16x128xf32, #tpu.memory_space<vmem>>, vector<16x128xf32>
    %c0_1 = arith.constant 0 : index
    %c0_2 = arith.constant 0 : index
    %1 = vector.load %arg3[%c0_1, %c0_2] : memref<16x128xbf16, #tpu.memory_space<vmem>>, vector<16x128xbf16>
    %2 = arith.extf %1 : vector<16x128xbf16> to vector<16x128xf32>
    %cst = arith.constant 5.000000e-01 : f32
    %3 = vector.broadcast %cst : f32 to vector<16x128xf32>
    %4 = arith.mulf %3, %0 : vector<16x128xf32>
    %5 = math.tanh %4 : vector<16x128xf32>
    %cst_3 = arith.constant 5.000000e-01 : f32
    %6 = vector.broadcast %cst_3 : f32 to vector<16x128xf32>
    %7 = arith.mulf %6, %5 : vector<16x128xf32>
    %cst_4 = arith.constant 5.000000e-01 : f32
    %8 = vector.broadcast %cst_4 : f32 to vector<16x128xf32>
    %9 = arith.addf %7, %8 : vector<16x128xf32>
    %10 = arith.mulf %9, %2 : vector<16x128xf32>
    %11 = vector.shape_cast %10 : vector<16x128xf32> to vector<1x16x128xf32>
    %cst_5 = arith.constant dense<0.000000e+00> : vector<1xf32>
    %12 = vector.multi_reduction <add>, %11, %cst_5 [1, 2] : vector<1x16x128xf32> to vector<1xf32>
    %13 = vector.shape_cast %12 : vector<1xf32> to vector<1x1x1xf32>
    %14 = vector.extract %13[0, 0, 0] : f32 from vector<1x1x1xf32>
    %c0_6 = arith.constant 0 : index
    %c0_7 = arith.constant 0 : index
    %15 = memref.load %arg4[%c0_6, %c0_7] : memref<1x2xf32, #tpu.memory_space<smem>>
    memref.store %14, %arg4[%c0_6, %c0_7] : memref<1x2xf32, #tpu.memory_space<smem>>
    %16 = vector.shape_cast %9 : vector<16x128xf32> to vector<1x16x128xf32>
    %cst_8 = arith.constant dense<0.000000e+00> : vector<1xf32>
    %17 = vector.multi_reduction <add>, %16, %cst_8 [1, 2] : vector<1x16x128xf32> to vector<1xf32>
    %18 = vector.shape_cast %17 : vector<1xf32> to vector<1x1x1xf32>
    %19 = vector.extract %18[0, 0, 0] : f32 from vector<1x1x1xf32>
    %20 = vector.shape_cast %2 : vector<16x128xf32> to vector<1x16x128xf32>
    %cst_9 = arith.constant dense<0.000000e+00> : vector<1xf32>
    %21 = vector.multi_reduction <add>, %20, %cst_9 [1, 2] : vector<1x16x128xf32> to vector<1xf32>
    %22 = vector.shape_cast %21 : vector<1xf32> to vector<1x1x1xf32>
    %23 = vector.extract %22[0, 0, 0] : f32 from vector<1x1x1xf32>
    %24 = arith.addf %19, %23 : f32
    %c0_10 = arith.constant 0 : index
    %c1 = arith.constant 1 : index
    %25 = memref.load %arg4[%c0_10, %c1] : memref<1x2xf32, #tpu.memory_space<smem>>
    memref.store %24, %arg4[%c0_10, %c1] : memref<1x2xf32, #tpu.memory_space<smem>>
    return
  }
  func.func @transform_0(%arg0: i32, %arg1: i32) -> (i32, i32) {
    %c1_i32 = arith.constant 1 : i32
    %0 = arith.muli %arg0, %c1_i32 : i32
    %1 = arith.addi %0, %arg1 : i32
    %c0_i32 = arith.constant 0 : i32
    %c0_i32_0 = arith.constant 0 : i32
    return %1, %c0_i32 : i32, i32
  }
  func.func @transform_1(%arg0: i32, %arg1: i32) -> (i32, i32) {
    %c1_i32 = arith.constant 1 : i32
    %0 = arith.muli %arg0, %c1_i32 : i32
    %1 = arith.addi %0, %arg1 : i32
    %c0_i32 = arith.constant 0 : i32
    %c0_i32_0 = arith.constant 0 : i32
    return %1, %c0_i32 : i32, i32
  }
  func.func @transform_2(%arg0: i32, %arg1: i32) -> (i32, i32) {
    %c0_i32 = arith.constant 0 : i32
    %c0_i32_0 = arith.constant 0 : i32
    return %arg0, %c0_i32 : i32, i32
  }
}

</mosaic_0001>

<llo_original>
// kernel: tpu_custom_call.1
$region0: #{tpu_custom_call.1}
  #allocation0 [shape = 'u32[]', space=smem, size = 0x4, offset = 0x4, fixed_abs, tag = 'smem constant byte address 0x4 - core index']
  #allocation1 [shape = 'u32[144,128]{1,0:T(1,128)}', space=vmem, size = 0x12000, scoped, tag = 'internal scratch']
  #allocation2 [shape = 'f32[8,128]{1,0:T(8,128)}', space=vmem, size = 0x1000, scoped, tag = 'scratch operand']
  #allocation3 [shape = 'f32[8,128]{1,0:T(8,128)}', space=vmem, size = 0x1000, scoped, tag = 'scratch operand']
  %s0 = inlined_call_operand.hbm [shape: f32[16,128], index: 0, kind: input, shape index: {}]
  %s1 = inlined_call_operand.hbm [shape: bf16[16,128], index: 1, kind: input, shape index: {}]
  %s2 = inlined_call_operand.hbm [shape: f32[1,2], index: 2, kind: output, shape index: {}]
  %s3 = sld [smem:[#allocation0]]
  $region26: #{tpu_custom_call.1} parent=0
    _
  %s5 = ssub.s32 1, %s3
  %s6 = scalar_select 0, %s5, %s3
  $region1: #{tpu_custom_call.1} parent=0
    #allocation4 [shape = 'u8[8192]{0}', space=vmem, size = 0x2000, scoped, tag = 'input window, operand 0, single buffered']
    #allocation5 [shape = 's32[1]{0}', space=sflag, size = 0x4, scoped, tag = 'scoped memory for tpu_custom_call.1']
    #allocation6 [shape = 's32[1]{0}', space=sflag, size = 0x4, scoped, tag = 'scoped memory for tpu_custom_call.1']
    #allocation7 [shape = 'u8[4096]{0}', space=vmem, size = 0x1000, scoped, tag = 'input window, operand 1, single buffered']
    #allocation8 [shape = 's32[1]{0}', space=sflag, size = 0x4, scoped, tag = 'scoped memory for tpu_custom_call.1']
    #allocation9 [shape = 'u8[512]{0}', space=smem, size = 0x200, scoped, tag = 'output window, operand 0, single buffered']
    %7 = vsyncpa [#allocation5], 0
    %8 = vsyncpa [#allocation8], 0
    %9 = vsyncpa [#allocation6], 0
    // Predicated region
    $region2: #{tpu_custom_call.1} parent=1 // pred_check
      _
    $region3: #{tpu_custom_call.1} parent=1 // pred_check_branch
      %11 = sbr.rel (0) target = $region5
    $region4: #{tpu_custom_call.1} parent=1 // pred_region
      %s12 = sadd.s32 0, 0
      %s13 = smul.u32 2, %s12
      %s15 = ssub.s32 256, 256
      %16 = vsyncadd [#allocation5], %s15
      %s17 = smul.addr %s13, 128
      %s18 = scalar_lea.hbm %s0, %s17
      %s19 = sshll.u32 [#allocation4], 4
      %s20 = int_to_ptr.vmem [resolvable:$true] %s19
      %25 = dma.hbm_to_vmem [thread:$0]  %s18, 256, %s20, [#allocation5], 128, 128, 8
    $region5: #{tpu_custom_call.1} parent=1 // pred_fallthru
      _
    // Predicated region
    $region6: #{tpu_custom_call.1} parent=1 // pred_check
      _
    $region7: #{tpu_custom_call.1} parent=1 // pred_check_branch
      %27 = sbr.rel (0) target = $region9
    $region8: #{tpu_custom_call.1} parent=1 // pred_region
      %s28 = sadd.s32 0, 0
      %s29 = smul.u32 2, %s28
      %s31 = ssub.s32 128, 128
      %32 = vsyncadd [#allocation8], %s31
      %s33 = smul.addr %s29, 64
      %s34 = scalar_lea.hbm %s1, %s33
      %s35 = sshll.u32 [#allocation7], 4
      %s36 = int_to_ptr.vmem [resolvable:$true] %s35
      %41 = dma.hbm_to_vmem [thread:$0]  %s34, 128, %s36, [#allocation8], 64, 64, 4
    $region9: #{tpu_custom_call.1} parent=1 // pred_fallthru
      _
    // Predicated region
    $region10: #{tpu_custom_call.1} parent=1 // pred_check
      _
    $region11: #{tpu_custom_call.1} parent=1 // pred_check_branch
      %43 = sbr.rel (0) target = $region13
    $region12: #{tpu_custom_call.1} parent=1 // pred_region
      %44 = dma.done [#allocation5], 256
    $region13: #{tpu_custom_call.1} parent=1 // pred_fallthru
      _
    // Predicated region
    $region14: #{tpu_custom_call.1} parent=1 // pred_check
      _
    $region15: #{tpu_custom_call.1} parent=1 // pred_check_branch
      %46 = sbr.rel (0) target = $region17
    $region16: #{tpu_custom_call.1} parent=1 // pred_region
      %47 = dma.done [#allocation8], 128
    $region17: #{tpu_custom_call.1} parent=1 // pred_fallthru
      _
    %s48 = sadd.s32 0, 0
    %s49 = smul.u32 2, %s48
    %s50 = sadd.s32 0, 0
    %s51 = smul.u32 2, %s50
    %v52 = vld [vmem:[#allocation4] sm:$0xff]
    %v53 = vld [vmem:[#allocation4 + $0x8] sm:$0xff]
    %v54 = vld [vmem:[#allocation7] sm:$0xf]
    %v55 = vld [vmem:[#allocation7 + $0x4] sm:$0xf]
    %v56 = vunpack.c.l.bf16 %v54
    %v57 = vunpack.c.l.bf16 %v55
    %v58 = vmul.f32 %v52, 0.5
    %v59 = vmul.f32 %v53, 0.5
    %v60 = vtanh.pop %v58
    %v61 = vtanh.pop %v59
    %v62 = vmul.f32 %v60, 0.5
    %v63 = vmul.f32 %v61, 0.5
    %v64 = vadd.f32 %v62, 0.5
    %v65 = vadd.f32 %v63, 0.5
    %v66 = vmul.f32 %v64, %v56
    %v67 = vmul.f32 %v65, %v57
    %v68 = vadd.f32 %v66, %v67
    %69 = vadd.xlane.f32.xlu0 %v68
    %v70 = vpop.xlane.xlu0 %69
    %v71 = vrot.slane %v70, 4
    %v72 = vadd.f32 %v70, %v71
    %v73 = vrot.slane %v72, 2
    %v74 = vadd.f32 %v72, %v73
    %v75 = vrot.slane %v74, 1
    %v76 = vadd.f32 %v74, %v75
    %s77 = vtos %v76
    %s78 = scalar_lea.smem [#allocation9], 0
    %79 = sst [smem:[%s78]] %s77
    %v80 = vadd.f32 %v64, %v65
    %81 = vadd.xlane.f32.xlu0 %v80
    %v82 = vpop.xlane.xlu0 %81
    %v83 = vrot.slane %v82, 4
    %v84 = vadd.f32 %v82, %v83
    %v85 = vrot.slane %v84, 2
    %v86 = vadd.f32 %v84, %v85
    %v87 = vrot.slane %v86, 1
    %v88 = vadd.f32 %v86, %v87
    %s89 = vtos %v88
    %v90 = vadd.f32 %v56, %v57
    %91 = vadd.xlane.f32.xlu0 %v90
    %v92 = vpop.xlane.xlu0 %91
    %v93 = vrot.slane %v92, 4
    %v94 = vadd.f32 %v92, %v93
    %v95 = vrot.slane %v94, 2
    %v96 = vadd.f32 %v94, %v95
    %v97 = vrot.slane %v96, 1
    %v98 = vadd.f32 %v96, %v97
    %s99 = vtos %v98
    %s100 = sadd.f32 %s89, %s99
    %s101 = scalar_lea.smem [#allocation9], 1
    %102 = sst [smem:[%s101]] %s100
    // Predicated region
    $region18: #{tpu_custom_call.1} parent=1 // pred_check
      _
    $region19: #{tpu_custom_call.1} parent=1 // pred_check_branch
      %104 = sbr.rel (0) target = $region21
    $region20: #{tpu_custom_call.1} parent=1 // pred_region
      %s106 = ssub.s32 16, 16
      %107 = vsyncadd [#allocation6], %s106
      %110 = dma.smem_to_hbm [#allocation9], 16, %s2, [#allocation6]
    $region21: #{tpu_custom_call.1} parent=1 // pred_fallthru
      _
    // Predicated region
    $region22: #{tpu_custom_call.1} parent=1 // pred_check
      _
    $region23: #{tpu_custom_call.1} parent=1 // pred_check_branch
      %112 = sbr.rel (0) target = $region25
    $region24: #{tpu_custom_call.1} parent=1 // pred_region
      %113 = dma.done [#allocation6], 16
    $region25: #{tpu_custom_call.1} parent=1 // pred_fallthru
      _
    %114 = sfence
    %115 = vsyncpa [#allocation5], 1
    %116 = vsyncpa [#allocation8], 1
    %117 = vsyncpa [#allocation6], 1

</llo_original>
